<compile_context>
chip_gen: v6e
topology: v6e:2x2x1
jax: 0.10.0
libtpu: 0.0.40
codegen_flags: <defaults>
</compile_context>

<pallas_src>
import jax
import jax.numpy as jnp
from jax.experimental import pallas as pl
from jax.experimental.pallas import tpu as pltpu


def _conv_rows(w, b, x):
    """1x1 conv in channel-major layout: (Cout, Cin) x (Cin, TM) -> (Cout, TM).

    K == Cin is tiny (3), so this is done as Cin broadcast multiply-adds on the
    VPU instead of a ~1%-utilized MXU matmul (keep-as-is per perf review).
    """
    y = b + w[:, 0:1] * x[0:1, :]
    for k in range(1, w.shape[1]):
        y = y + w[:, k:k + 1] * x[k:k + 1, :]
    return y


def _normalize_kernel(x_ref, ws_ref, sh_ref, o_ref):
    # x_ref: (Cin, TM); ws_ref: (48, Cin) = W*invstd; sh_ref: (48,1) = (b-mean)*invstd
    # o_ref: (96, TM); channels 48..95 duplicate 0..47 ([conv1|conv2|conv1|conv2]).
    #
    # NOTE: on the partial last M tile the columns of x_ref past the real
    # flattened-spatial extent hold unspecified data; the corresponding output
    # columns are out-of-bounds and dropped by Pallas on writeback.  Do NOT add
    # any lane-wise reduction here without masking those columns first.
    y = _conv_rows(ws_ref[...], sh_ref[...], x_ref[...])          # (48, TM)
    c = y.shape[0]
    o_ref[0:c, :] = y
    o_ref[c:2 * c, :] = y


def model_forward(x_nchw, w1, b1, w2, b2, *, eps=1e-5):
    """x_nchw: (N, 3, H, W) float32. Returns (N, 96, H+2, W+2) float32 (NCHW)."""
    N, Cin, H, W = x_nchw.shape
    Hp, Wp = H + 2, W + 2
    Mimg = Hp * Wp

    # Deduplicate the repeated branches: 48 unique output channels.
    c1, c2 = w1.shape[0], w2.shape[0]
    C48 = c1 + c2
    Cout = 2 * C48
    w48 = jnp.concatenate([w1.reshape(c1, Cin), w2.reshape(c2, Cin)], axis=0)
    b48 = jnp.concatenate([b1, b2]).reshape(C48, 1)

    # ---- Analytic BatchNorm batch statistics (replaces the old stats pass).
    # Over the zero-padded field of P = N*Hp*Wp positions:
    #   mean_y[c] = W_c . E[x] + b_c
    #   var_y[c]  = W_c Cov(x) W_c^T            (bias cancels exactly)
    # and padded positions contribute zero to sum(x) and sum(x x^T), so both
    # moments come from the UNPADDED input via tiny einsums.
    P = jnp.float32(N * Mimg)
    sx = jnp.einsum('nchw->c', x_nchw)                              # (Cin,)
    sxx = jnp.einsum('nchw,ndhw->cd', x_nchw, x_nchw)               # (Cin, Cin)
    mx = (sx / P)[:, None]                                          # (Cin, 1)
    cov = sxx / P - mx @ mx.T                                       # (Cin, Cin)
    mean = w48 @ mx + b48                                           # (48, 1)
    var = jnp.maximum(
        jnp.sum((w48 @ cov) * w48, axis=1, keepdims=True), 0.0)     # (48, 1)
    invstd = jax.lax.rsqrt(var + eps)
    w_scaled = w48 * invstd                                         # BN folded
    shift = (b48 - mean) * invstd

    # conv `padding=1` with a 1x1 kernel == zero spatial pad of the (cheap,
    # 3-channel) input followed by a pure pointwise channel contraction.
    x_pad = jnp.pad(x_nchw, ((0, 0), (0, 0), (1, 1), (1, 1)))
    x_flat = x_pad.reshape(N, Cin, Mimg)          # channel-major; reshape only

    # Lane-dense M tile (multiple of 128).  Cap raised to 16384: the
    # double-buffered output tile is 2*96*tm*4 B ~= 12.6 MiB, input ~0.4 MiB,
    # well under the 24 MiB scoped-VMEM limit below on v5e/v6e/v7x; big tiles
    # amortize the ~0.35 us per-grid-step overhead.
    if Mimg >= 128:
        tm = min(16384, (Mimg // 128) * 128)
    else:
        tm = Mimg
    grid = (N, pl.cdiv(Mimg, tm))

    x_spec = pl.BlockSpec((None, Cin, tm), lambda n, m: (n, 0, m))
    w_spec = pl.BlockSpec((C48, Cin), lambda n, m: (0, 0))
    v_spec = pl.BlockSpec((C48, 1), lambda n, m: (0, 0))

    out_flat = pl.pallas_call(
        _normalize_kernel,
        out_shape=jax.ShapeDtypeStruct((N, Cout, Mimg), jnp.float32),
        grid=grid,
        in_specs=[x_spec, w_spec, v_spec],
        out_specs=pl.BlockSpec((None, Cout, tm), lambda n, m: (n, 0, m)),
        compiler_params=pltpu.CompilerParams(
            dimension_semantics=("parallel", "parallel"),
            vmem_limit_bytes=24 << 20),
    )(x_flat, w_scaled, shift)

    return out_flat.reshape(N, Cout, Hp, Wp)


def _reference(x, w1, b1, w2, b2, eps=1e-5):
    """Pure-JAX reference for the same (stand-in) semantics."""
    xp = jnp.pad(x, ((0, 0), (0, 0), (1, 1), (1, 1)))
    xh = jnp.transpose(xp, (0, 2, 3, 1))
    y1 = jnp.einsum('nhwc,oc->nhwo', xh, w1.reshape(w1.shape[0], -1)) + b1
    y2 = jnp.einsum('nhwc,oc->nhwo', xh, w2.reshape(w2.shape[0], -1)) + b2
    y = jnp.concatenate([y1, y2, y1, y2], axis=-1)
    mean = jnp.mean(y, axis=(0, 1, 2), keepdims=True)
    var = jnp.mean(jnp.square(y - mean), axis=(0, 1, 2), keepdims=True)
    yn = (y - mean) * jax.lax.rsqrt(var + eps)
    return jnp.transpose(yn, (0, 3, 1, 2))


if __name__ == "__main__":
    key = jax.random.PRNGKey(0)
    kx, k1, k2, k3, k4 = jax.random.split(key, 5)

    # Small, shape-consistent example (module requires 3 input channels).
    x = jax.random.normal(kx, (2, 3, 16, 16), dtype=jnp.float32)
    w1 = jax.random.normal(k1, (16, 3, 1, 1), dtype=jnp.float32) * 0.1
    b1 = jax.random.normal(k2, (16,), dtype=jnp.float32) * 0.1
    w2 = jax.random.normal(k3, (32, 3, 1, 1), dtype=jnp.float32) * 0.1
    b2 = jax.random.normal(k4, (32,), dtype=jnp.float32) * 0.1

    out = jax.jit(model_forward)(x, w1, b1, w2, b2)
    jax.block_until_ready(out)
    assert out.shape == (2, 96, 18, 18), out.shape

    ref = _reference(x, w1, b1, w2, b2)
    assert bool(jnp.allclose(out, ref, rtol=1e-3, atol=1e-3)), "mismatch vs reference"
    print("KERNEL_OK")
</pallas_src>

<mosaic_0001>
module attributes {stable_mosaic.version = 11 : i64} {
  func.func @_normalize_kernel(%arg0: i32, %arg1: i32, %arg2: memref<1x3x256xf32, #tpu.memory_space<vmem>>, %arg3: memref<48x3xf32, #tpu.memory_space<vmem>>, %arg4: memref<48x1xf32, #tpu.memory_space<vmem>>, %arg5: memref<1x96x256xf32, #tpu.memory_space<vmem>>) attributes {dimension_semantics = [#tpu.dimension_semantics<parallel>, #tpu.dimension_semantics<parallel>], iteration_bounds = array<i64: 2, 2>, scalar_prefetch = 0 : i64, scratch_operands = 0 : i64, tpu.core_type = #tpu.core_type<tc>, window_params = [{transform_indices = @transform_0, window_bounds = array<i64: 1, 3, 256>}, {pipeline_mode = #tpu.pipeline_mode<synchronous>, transform_indices = @transform_1, window_bounds = array<i64: 48, 3>}, {pipeline_mode = #tpu.pipeline_mode<synchronous>, transform_indices = @transform_2, window_bounds = array<i64: 48, 1>}, {transform_indices = @transform_3, window_bounds = array<i64: 1, 96, 256>}]} {
    %c0 = arith.constant 0 : index
    %c0_0 = arith.constant 0 : index
    %0 = vector.load %arg3[%c0, %c0_0] : memref<48x3xf32, #tpu.memory_space<vmem>>, vector<48x3xf32>
    %c0_1 = arith.constant 0 : index
    %c0_2 = arith.constant 0 : index
    %1 = vector.load %arg4[%c0_1, %c0_2] : memref<48x1xf32, #tpu.memory_space<vmem>>, vector<48x1xf32>
    %c0_3 = arith.constant 0 : index
    %c0_4 = arith.constant 0 : index
    %c0_5 = arith.constant 0 : index
    %2 = vector.load %arg2[%c0_3, %c0_4, %c0_5] : memref<1x3x256xf32, #tpu.memory_space<vmem>>, vector<1x3x256xf32>
    %3 = vector.shape_cast %2 : vector<1x3x256xf32> to vector<3x256xf32>
    %4 = vector.extract_strided_slice %0 {offsets = [0, 0], sizes = [48, 1], strides = [1, 1]} : vector<48x3xf32> to vector<48x1xf32>
    %5 = vector.extract_strided_slice %3 {offsets = [0, 0], sizes = [1, 256], strides = [1, 1]} : vector<3x256xf32> to vector<1x256xf32>
    %6 = vector.broadcast %4 : vector<48x1xf32> to vector<48x256xf32>
    %7 = vector.broadcast %5 : vector<1x256xf32> to vector<48x256xf32>
    %8 = arith.mulf %6, %7 : vector<48x256xf32>
    %9 = vector.broadcast %1 : vector<48x1xf32> to vector<48x256xf32>
    %10 = arith.addf %9, %8 : vector<48x256xf32>
    %11 = vector.extract_strided_slice %0 {offsets = [0, 1], sizes = [48, 1], strides = [1, 1]} : vector<48x3xf32> to vector<48x1xf32>
    %12 = vector.extract_strided_slice %3 {offsets = [1, 0], sizes = [1, 256], strides = [1, 1]} : vector<3x256xf32> to vector<1x256xf32>
    %13 = vector.broadcast %11 : vector<48x1xf32> to vector<48x256xf32>
    %14 = vector.broadcast %12 : vector<1x256xf32> to vector<48x256xf32>
    %15 = arith.mulf %13, %14 : vector<48x256xf32>
    %16 = arith.addf %10, %15 : vector<48x256xf32>
    %17 = vector.extract_strided_slice %0 {offsets = [0, 2], sizes = [48, 1], strides = [1, 1]} : vector<48x3xf32> to vector<48x1xf32>
    %18 = vector.extract_strided_slice %3 {offsets = [2, 0], sizes = [1, 256], strides = [1, 1]} : vector<3x256xf32> to vector<1x256xf32>
    %19 = vector.broadcast %17 : vector<48x1xf32> to vector<48x256xf32>
    %20 = vector.broadcast %18 : vector<1x256xf32> to vector<48x256xf32>
    %21 = arith.mulf %19, %20 : vector<48x256xf32>
    %22 = arith.addf %16, %21 : vector<48x256xf32>
    %c0_6 = arith.constant 0 : index
    %c0_7 = arith.constant 0 : index
    %c0_8 = arith.constant 0 : index
    %23 = vector.load %arg5[%c0_6, %c0_7, %c0_8] : memref<1x96x256xf32, #tpu.memory_space<vmem>>, vector<1x48x256xf32>
    %24 = vector.shape_cast %23 : vector<1x48x256xf32> to vector<48x256xf32>
    %25 = vector.shape_cast %22 : vector<48x256xf32> to vector<1x48x256xf32>
    tpu.vector_store %arg5[%c0_6, %c0_7, %c0_8], %25 {strides = array<i32>} : memref<1x96x256xf32, #tpu.memory_space<vmem>>, vector<1x48x256xf32>,
    %c0_9 = arith.constant 0 : index
    %c48 = arith.constant 48 : index
    %c0_10 = arith.constant 0 : index
    %26 = vector.load %arg5[%c0_9, %c48, %c0_10] : memref<1x96x256xf32, #tpu.memory_space<vmem>>, vector<1x48x256xf32>
    %27 = vector.shape_cast %26 : vector<1x48x256xf32> to vector<48x256xf32>
    %28 = vector.shape_cast %22 : vector<48x256xf32> to vector<1x48x256xf32>
    tpu.vector_store %arg5[%c0_9, %c48, %c0_10], %28 {strides = array<i32>} : memref<1x96x256xf32, #tpu.memory_space<vmem>>, vector<1x48x256xf32>,
    return
  }
  func.func @transform_0(%arg0: i32, %arg1: i32) -> (i32, i32, i32) {
    %c0_i32 = arith.constant 0 : i32
    %c0_i32_0 = arith.constant 0 : i32
    return %arg0, %c0_i32, %arg1 : i32, i32, i32
  }
  func.func @transform_1(%arg0: i32, %arg1: i32) -> (i32, i32) {
    %c0_i32 = arith.constant 0 : i32
    %c0_i32_0 = arith.constant 0 : i32
    %c0_i32_1 = arith.constant 0 : i32
    return %c0_i32, %c0_i32_0 : i32, i32
  }
  func.func @transform_2(%arg0: i32, %arg1: i32) -> (i32, i32) {
    %c0_i32 = arith.constant 0 : i32
    %c0_i32_0 = arith.constant 0 : i32
    %c0_i32_1 = arith.constant 0 : i32
    return %c0_i32, %c0_i32_0 : i32, i32
  }
  func.func @transform_3(%arg0: i32, %arg1: i32) -> (i32, i32, i32) {
    %c0_i32 = arith.constant 0 : i32
    %c0_i32_0 = arith.constant 0 : i32
    return %arg0, %c0_i32, %arg1 : i32, i32, i32
  }
}

</mosaic_0001>

<llo_original>
// kernel: model_forward.1
$region0: #{model_forward.1}
  #allocation0 [shape = 'u32[]', space=smem, size = 0x4, offset = 0x4, fixed_abs, tag = 'smem constant byte address 0x4 - core index']
  #allocation1 [shape = 'u32[144,128]{1,0:T(1,128)}', space=vmem, size = 0x12000, scoped, tag = 'internal scratch']
  %s0 = inlined_call_operand.vmem [shape: f32[2,3,324], index: 0, kind: input, shape index: {}]
  %s1 = inlined_call_operand.vmem [shape: f32[48,3], index: 1, kind: input, shape index: {}]
  %s2 = inlined_call_operand.vmem [shape: f32[48,1], index: 2, kind: input, shape index: {}]
  %s3 = inlined_call_operand.vmem [shape: f32[2,96,324], index: 3, kind: output, shape index: {}]
  %s4 = sld [smem:[#allocation0]]
  $region107: #{model_forward.1} parent=0
    _
  %s6 = ssub.s32 1, %s4
  %s7 = scalar_select 0, %s6, %s4
  $region1: #{model_forward.1} parent=0
    #allocation2 [shape = 'u8[196608]{0}', space=vmem, size = 0x30000, scoped, tag = 'output window, operand 0']
    loop: start=0, step=1, limit=6
    $region2: #{model_forward.1} parent=1 // loop_pre_header
      _
    $region3: #{model_forward.1} parent=1 // loop_header
      %s9 = sphi 0, %s13
      %p10 = scmp.ge.s32.totalorder %s9, 6
      %s16 = sphi 0, %s28
      %s17 = sphi 0, %s24
      %s18 = sphi 0, %s16
      %s19 = sphi 0, %s17
      %s20 = sphi 0, %s18
      %s21 = sphi 0, %s19
      %s33 = sphi 0, %s35
      %s36 = sphi 0, %s33
      %s37 = sphi 0, %s36
      %s53 = sphi 0, %s37
      %s57 = sphi 0, %s57
      %s59 = sphi 0, %s57
      %s60 = sphi 0, %s59
      %s74 = sphi 0, %s60
      %s78 = sphi 0, %s78
      %s80 = sphi 0, %s78
      %s81 = sphi 0, %s80
      %s95 = sphi 0, %s81
      %s103 = sphi 0, %s105
      %s106 = sphi 0, %s103
      %s107 = sphi 0, %s106
      %s123 = sphi 0, %s107
    $region4: #{model_forward.1} parent=1 // loop_header_branch
      %12 = sbr.rel (%p10) target = $region8
    $region5: #{model_forward.1} parent=1 // loop_body
      %s14 = ssub.s32 %s9, 1
      %s15 = ssub.s32 %s9, 2
      %s22 = sadd.s32 1, %s17
      %p23 = scmp.ge.s32.totalorder %s22, 2
      %s24 = scalar_select %p23, 0, %s22
      %s25 = sadd.s32 1, %s16
      %s26 = scalar_select %p23, %s25, %s16
      %p27 = scmp.ge.s32.totalorder %s26, 2
      %s28 = scalar_select %p27, 0, %s26
      %s29 = ssub.s32 %s16, %s28
      %s30 = ssub.s32 %s17, %s24
      %s31 = sor.u32 %s29, %s30
      %p32 = scmp.eq.s32.totalorder %s31, 0
      %s34 = sadd.s32 %s33, 1
      %s35 = scalar_select %p32, %s33, %s34
      %p38 = pneg %p32
      %p39 = scmp.eq.s32.totalorder %s9, 3
      %p40 = por %p38, %p39
      %p41 = scmp.ne.s32.totalorder %s33, %s36
      %p42 = scmp.eq.s32.totalorder %s9, 0
      %p43 = por %p41, %p42
      %p44 = scmp.ne.s32.totalorder %s33, %s36
      %p45 = scmp.eq.s32.totalorder %s14, 3
      %p46 = por %p44, %p45
      %p47 = scmp.ne.s32.totalorder %s36, %s37
      %p48 = scmp.eq.s32.totalorder %s14, 0
      %p49 = por %p47, %p48
      %p50 = scmp.ne.s32.totalorder %s36, %s37
      %p51 = scmp.eq.s32.totalorder %s15, 3
      %p52 = por %p50, %p51
      %p54 = scmp.ne.s32.totalorder %s37, %s53
      %p55 = scmp.eq.s32.totalorder %s15, 0
      %p56 = por %p54, %p55
      %s58 = sadd.s32 %s57, 1
      %p61 = scmp.eq.s32.totalorder %s9, 3
      %p62 = scmp.ne.s32.totalorder %s57, %s59
      %p63 = scmp.eq.s32.totalorder %s9, 0
      %p64 = por %p62, %p63
      %p65 = scmp.ne.s32.totalorder %s57, %s59
      %p66 = scmp.eq.s32.totalorder %s14, 3
      %p67 = por %p65, %p66
      %p68 = scmp.ne.s32.totalorder %s59, %s60
      %p69 = scmp.eq.s32.totalorder %s14, 0
      %p70 = por %p68, %p69
      %p71 = scmp.ne.s32.totalorder %s59, %s60
      %p72 = scmp.eq.s32.totalorder %s15, 3
      %p73 = por %p71, %p72
      %p75 = scmp.ne.s32.totalorder %s60, %s74
      %p76 = scmp.eq.s32.totalorder %s15, 0
      %p77 = por %p75, %p76
      %s79 = sadd.s32 %s78, 1
      %p82 = scmp.eq.s32.totalorder %s9, 3
      %p83 = scmp.ne.s32.totalorder %s78, %s80
      %p84 = scmp.eq.s32.totalorder %s9, 0
      %p85 = por %p83, %p84
      %p86 = scmp.ne.s32.totalorder %s78, %s80
      %p87 = scmp.eq.s32.totalorder %s14, 3
      %p88 = por %p86, %p87
      %p89 = scmp.ne.s32.totalorder %s80, %s81
      %p90 = scmp.eq.s32.totalorder %s14, 0
      %p91 = por %p89, %p90
      %p92 = scmp.ne.s32.totalorder %s80, %s81
      %p93 = scmp.eq.s32.totalorder %s15, 3
      %p94 = por %p92, %p93
      %p96 = scmp.ne.s32.totalorder %s81, %s95
      %p97 = scmp.eq.s32.totalorder %s15, 0
      %p98 = por %p96, %p97
      %s99 = ssub.s32 %s16, %s28
      %s100 = ssub.s32 %s17, %s24
      %s101 = sor.u32 %s99, %s100
      %p102 = scmp.eq.s32.totalorder %s101, 0
      %s104 = sadd.s32 %s103, 1
      %s105 = scalar_select %p102, %s103, %s104
      %p108 = pneg %p102
      %p109 = scmp.eq.s32.totalorder %s9, 3
      %p110 = por %p108, %p109
      %p111 = scmp.ne.s32.totalorder %s103, %s106
      %p112 = scmp.eq.s32.totalorder %s9, 0
      %p113 = por %p111, %p112
      %p114 = scmp.ne.s32.totalorder %s103, %s106
      %p115 = scmp.eq.s32.totalorder %s14, 3
      %p116 = por %p114, %p115
      %p117 = scmp.ne.s32.totalorder %s106, %s107
      %p118 = scmp.eq.s32.totalorder %s14, 0
      %p119 = por %p117, %p118
      %p120 = scmp.ne.s32.totalorder %s106, %s107
      %p121 = scmp.eq.s32.totalorder %s15, 3
      %p122 = por %p120, %p121
      %p124 = scmp.ne.s32.totalorder %s107, %s123
      %p125 = scmp.eq.s32.totalorder %s15, 0
      %p126 = por %p124, %p125
      %p127 = scmp.le.s32.totalorder 1, %s9
      %p128 = scmp.lt.s32.totalorder %s9, 5
      %p129 = pnand %p127, %p128
      %p130 = pneg %p129
      // Predicated region
      $region9: #{model_forward.1} parent=5 // pred_check
        _
      $region10: #{model_forward.1} parent=5 // pred_check_branch
        %132 = sbr.rel (%p129) target = $region12
      $region11: #{model_forward.1} parent=5 // pred_region
        %s133 = ssub.s32 %s9, 1
        // Predicated region
        $region13: #{model_forward.1} parent=11 // pred_check
          %p134 = pneg %p70
        $region14: #{model_forward.1} parent=11 // pred_check_branch
          %136 = sbr.rel (%p134) target = $region16
        $region15: #{model_forward.1} parent=11 // pred_region
          _
        $region16: #{model_forward.1} parent=11 // pred_fallthru
          _
        // Predicated region
        $region17: #{model_forward.1} parent=11 // pred_check
          %p137 = pneg %p91
        $region18: #{model_forward.1} parent=11 // pred_check_branch
          %139 = sbr.rel (%p137) target = $region20
        $region19: #{model_forward.1} parent=11 // pred_region
          _
        $region20: #{model_forward.1} parent=11 // pred_fallthru
          _
      $region12: #{model_forward.1} parent=5 // pred_fallthru
        _
      %p140 = scmp.lt.s32.totalorder %s9, 4
      // Predicated region
      $region21: #{model_forward.1} parent=5 // pred_check
        %p141 = pneg %p140
      $region22: #{model_forward.1} parent=5 // pred_check_branch
        %143 = sbr.rel (%p141) target = $region24
      $region23: #{model_forward.1} parent=5 // pred_region
        // Predicated region
        $region25: #{model_forward.1} parent=23 // pred_check
          %p144 = pneg %p43
        $region26: #{model_forward.1} parent=23 // pred_check_branch
          %146 = sbr.rel (%p144) target = $region28
        $region27: #{model_forward.1} parent=23 // pred_region
          %s147 = smul.u32 2, %s17
          %s148 = ssub.s32 3, %s147
          %p149 = scmp.lt.s32.totalorder %s148, 2
          %s150 = scalar_select %p149, %s148, 2
          %s151 = smul.u32 64, %s150
          %p152 = scmp.lt.s32.totalorder %s16, 1
          %s153 = scalar_select %p152, %s16, 1
          %p154 = scmp.lt.s32.totalorder %s147, 2
          %s155 = scalar_select %p154, %s147, 2
          %s156 = smul.addr %s153, 3
          %s157 = sadd.s32 %s155, %s156
          %s158 = smul.addr %s157, 4
          %s159 = scalar_lea.vmem %s0, %s158
          %s160 = smul.u32 2, %s17
          %s161 = ssub.s32 3, %s160
          %p162 = scmp.lt.s32.totalorder %s161, 2
          %s163 = scalar_select %p162, %s161, 2
          %s164 = smul.u32 64, %s163
        $region28: #{model_forward.1} parent=23 // pred_fallthru
          _
      $region24: #{model_forward.1} parent=5 // pred_fallthru
        _
      %p165 = scmp.le.s32.totalorder 1, %s9
      %p166 = scmp.lt.s32.totalorder %s9, 5
      %p167 = pnand %p165, %p166
      %p168 = pneg %p167
      // Predicated region
      $region29: #{model_forward.1} parent=5 // pred_check
        _
      $region30: #{model_forward.1} parent=5 // pred_check_branch
        %170 = sbr.rel (%p167) target = $region32
      $region31: #{model_forward.1} parent=5 // pred_region
        %s171 = ssub.s32 %s9, 1
        %s172 = smul.u32 2, %s19
        %s173 = ssub.s32 3, %s172
        %p174 = scmp.lt.s32.totalorder %s173, 2
        %s175 = scalar_select %p174, %s173, 2
        %s176 = smul.u32 64, %s175
        %p177 = scmp.lt.s32.totalorder %s18, 1
        %s178 = scalar_select %p177, %s18, 1
        %p179 = scmp.lt.s32.totalorder %s172, 2
        %s180 = scalar_select %p179, %s172, 2
        %s181 = smul.addr %s178, 3
        %s182 = sadd.s32 %s180, %s181
        %s183 = smul.addr %s182, 4
        %s184 = scalar_lea.vmem %s0, %s183
        %p185 = pneg %p49
        %p186 = pneg %p46
        %p187 = pneg %p70
        %p188 = pneg %p67
        %p189 = pneg %p91
        %p190 = pneg %p88
        %p191 = pneg %p119
        %p192 = pneg %p116
        %s193 = sand.u32 %s106, 1
        %s194 = sand.u32 %s106, 1
        %s195 = smul.addr %s194, 192
        %s196 = scalar_lea.vmem [#allocation2], %s195
        %s197 = smul.u32 2, %s19
        %s198 = ssub.s32 3, %s197
        %p199 = scmp.lt.s32.totalorder %s198, 2
        %s200 = scalar_select %p199, %s198, 2
        %s201 = smul.u32 64, %s200
        %p202 = scmp.lt.s32.totalorder %s18, 1
        %s203 = scalar_select %p202, %s18, 1
        %p204 = scmp.lt.s32.totalorder %s197, 2
        %s205 = scalar_select %p204, %s197, 2
        %s206 = smul.addr %s203, 3
        %s207 = sadd.s32 %s205, %s206
        %s208 = smul.addr %s207, 4
        %s209 = scalar_lea.vmem %s0, %s208
        %s210 = smul.u32 2, %s19
        %s211 = ssub.s32 3, %s210
        %p212 = scmp.lt.s32.totalorder %s211, 2
        %s213 = scalar_select %p212, %s211, 2
        %s214 = smul.u32 64, %s213
        %s215 = smul.u32 2, %s19
        %s216 = ssub.s32 3, %s215
        %p217 = scmp.lt.s32.totalorder %s216, 2
        %s218 = scalar_select %p217, %s216, 2
        %s219 = smul.u32 1536, %s218
        %v220 = vld [vmem:[%s1] sm:$0xff]
        %v221 = vld [vmem:[%s1 + $0x8] sm:$0xff]
        %v222 = vld [vmem:[%s1 + $0x10] sm:$0xff]
        %v223 = vld [vmem:[%s1 + $0x18] sm:$0xff]
        %v224 = vld [vmem:[%s1 + $0x20] sm:$0xff]
        %v225 = vld [vmem:[%s1 + $0x28] sm:$0xff]
        %v226 = vld [vmem:[%s2] sm:$0xff]
        %v227 = vld [vmem:[%s2 + $0x8] sm:$0xff]
        %v228 = vld [vmem:[%s2 + $0x10] sm:$0xff]
        %v229 = vld [vmem:[%s2 + $0x18] sm:$0xff]
        %v230 = vld [vmem:[%s2 + $0x20] sm:$0xff]
        %v231 = vld [vmem:[%s2 + $0x28] sm:$0xff]
        %v232 = vld [vmem:[%s209] sm:$0x77]
        %234 = vset.pattern.permute.xlu0 0
        %235 = vperm.xlu0 %234, %v220
        %v236 = vpop.permute.xlu0 %235
        %239 = vset.pattern.permute.xlu0 0
        %240 = vperm.xlu0 %239, %v221
        %v241 = vpop.permute.xlu0 %240
        %244 = vset.pattern.permute.xlu0 0
        %245 = vperm.xlu0 %244, %v222
        %v246 = vpop.permute.xlu0 %245
        %249 = vset.pattern.permute.xlu0 0
        %250 = vperm.xlu0 %249, %v223
        %v251 = vpop.permute.xlu0 %250
        %254 = vset.pattern.permute.xlu0 0
        %255 = vperm.xlu0 %254, %v224
        %v256 = vpop.permute.xlu0 %255
        %259 = vset.pattern.permute.xlu0 0
        %260 = vperm.xlu0 %259, %v225
        %v261 = vpop.permute.xlu0 %260
        %v264 = vlaneseq
        %v265 = vshrl.u32 %v264, 7
        %v266 = vsub.s32 0, %v265
        %v267 = vrot.slane %v232, %v266
        %v268 = vlaneseq
        %v269 = vshrl.u32 %v268, 7
        %v270 = vsub.s32 4, %v269
        %v271 = vrot.slane %v232, %v270
        %v274 = vlaneseq
        %v275 = vshrl.u32 %v274, 7
        %v276 = vsub.s32 0, %v275
        %v277 = vrot.slane %v267, %v276
        %v278 = vlaneseq
        %v279 = vshrl.u32 %v278, 7
        %v280 = vsub.s32 0, %v279
        %v281 = vrot.slane %v271, %v280
        %v282 = vmul.f32 %v236, %v277
        %v283 = vmul.f32 %v236, %v281
        %v284 = vmul.f32 %v241, %v277
        %v285 = vmul.f32 %v241, %v281
        %v286 = vmul.f32 %v246, %v277
        %v287 = vmul.f32 %v246, %v281
        %v288 = vmul.f32 %v251, %v277
        %v289 = vmul.f32 %v251, %v281
        %v290 = vmul.f32 %v256, %v277
        %v291 = vmul.f32 %v256, %v281
        %v292 = vmul.f32 %v261, %v277
        %v293 = vmul.f32 %v261, %v281
        %295 = vset.pattern.permute.xlu0 0
        %296 = vperm.xlu0 %295, %v226
        %v297 = vpop.permute.xlu0 %296
        %300 = vset.pattern.permute.xlu0 0
        %301 = vperm.xlu0 %300, %v227
        %v302 = vpop.permute.xlu0 %301
        %305 = vset.pattern.permute.xlu0 0
        %306 = vperm.xlu0 %305, %v228
        %v307 = vpop.permute.xlu0 %306
        %310 = vset.pattern.permute.xlu0 0
        %311 = vperm.xlu0 %310, %v229
        %v312 = vpop.permute.xlu0 %311
        %315 = vset.pattern.permute.xlu0 0
        %316 = vperm.xlu0 %315, %v230
        %v317 = vpop.permute.xlu0 %316
        %320 = vset.pattern.permute.xlu0 0
        %321 = vperm.xlu0 %320, %v231
        %v322 = vpop.permute.xlu0 %321
        %v324 = vadd.f32 %v297, %v282
        %v325 = vadd.f32 %v297, %v283
        %v326 = vadd.f32 %v302, %v284
        %v327 = vadd.f32 %v302, %v285
        %v328 = vadd.f32 %v307, %v286
        %v329 = vadd.f32 %v307, %v287
        %v330 = vadd.f32 %v312, %v288
        %v331 = vadd.f32 %v312, %v289
        %v332 = vadd.f32 %v317, %v290
        %v333 = vadd.f32 %v317, %v291
        %v334 = vadd.f32 %v322, %v292
        %v335 = vadd.f32 %v322, %v293
        %336 = vset.pattern.permute.xlu0 1
        %337 = vperm.xlu0 %336, %v220
        %v338 = vpop.permute.xlu0 %337
        %340 = vset.pattern.permute.xlu0 1
        %341 = vperm.xlu0 %340, %v221
        %v342 = vpop.permute.xlu0 %341
        %344 = vset.pattern.permute.xlu0 1
        %345 = vperm.xlu0 %344, %v222
        %v346 = vpop.permute.xlu0 %345
        %348 = vset.pattern.permute.xlu0 1
        %349 = vperm.xlu0 %348, %v223
        %v350 = vpop.permute.xlu0 %349
        %352 = vset.pattern.permute.xlu0 1
        %353 = vperm.xlu0 %352, %v224
        %v354 = vpop.permute.xlu0 %353
        %356 = vset.pattern.permute.xlu0 1
        %357 = vperm.xlu0 %356, %v225
        %v358 = vpop.permute.xlu0 %357
        %v360 = vlaneseq
        %v361 = vshrl.u32 %v360, 7
        %v362 = vsub.s32 1, %v361
        %v363 = vrot.slane %v232, %v362
        %v364 = vlaneseq
        %v365 = vshrl.u32 %v364, 7
        %v366 = vsub.s32 5, %v365
        %v367 = vrot.slane %v232, %v366
        %v370 = vlaneseq
        %v371 = vshrl.u32 %v370, 7
        %v372 = vsub.s32 1, %v371
        %v373 = vrot.slane %v363, %v372
        %v374 = vlaneseq
        %v375 = vshrl.u32 %v374, 7
        %v376 = vsub.s32 1, %v375
        %v377 = vrot.slane %v367, %v376
        %v378 = vmul.f32 %v338, %v373
        %v379 = vmul.f32 %v338, %v377
        %v380 = vmul.f32 %v342, %v373
        %v381 = vmul.f32 %v342, %v377
        %v382 = vmul.f32 %v346, %v373
        %v383 = vmul.f32 %v346, %v377
        %v384 = vmul.f32 %v350, %v373
        %v385 = vmul.f32 %v350, %v377
        %v386 = vmul.f32 %v354, %v373
        %v387 = vmul.f32 %v354, %v377
        %v388 = vmul.f32 %v358, %v373
        %v389 = vmul.f32 %v358, %v377
        %v390 = vadd.f32 %v324, %v378
        %v391 = vadd.f32 %v325, %v379
        %v392 = vadd.f32 %v326, %v380
        %v393 = vadd.f32 %v327, %v381
        %v394 = vadd.f32 %v328, %v382
        %v395 = vadd.f32 %v329, %v383
        %v396 = vadd.f32 %v330, %v384
        %v397 = vadd.f32 %v331, %v385
        %v398 = vadd.f32 %v332, %v386
        %v399 = vadd.f32 %v333, %v387
        %v400 = vadd.f32 %v334, %v388
        %v401 = vadd.f32 %v335, %v389
        %402 = vset.pattern.permute.xlu0 2
        %403 = vperm.xlu0 %402, %v220
        %v404 = vpop.permute.xlu0 %403
        %406 = vset.pattern.permute.xlu0 2
        %407 = vperm.xlu0 %406, %v221
        %v408 = vpop.permute.xlu0 %407
        %410 = vset.pattern.permute.xlu0 2
        %411 = vperm.xlu0 %410, %v222
        %v412 = vpop.permute.xlu0 %411
        %414 = vset.pattern.permute.xlu0 2
        %415 = vperm.xlu0 %414, %v223
        %v416 = vpop.permute.xlu0 %415
        %418 = vset.pattern.permute.xlu0 2
        %419 = vperm.xlu0 %418, %v224
        %v420 = vpop.permute.xlu0 %419
        %422 = vset.pattern.permute.xlu0 2
        %423 = vperm.xlu0 %422, %v225
        %v424 = vpop.permute.xlu0 %423
        %v426 = vlaneseq
        %v427 = vshrl.u32 %v426, 7
        %v428 = vsub.s32 2, %v427
        %v429 = vrot.slane %v232, %v428
        %v430 = vlaneseq
        %v431 = vshrl.u32 %v430, 7
        %v432 = vsub.s32 6, %v431
        %v433 = vrot.slane %v232, %v432
        %v436 = vlaneseq
        %v437 = vshrl.u32 %v436, 7
        %v438 = vsub.s32 2, %v437
        %v439 = vrot.slane %v429, %v438
        %v440 = vlaneseq
        %v441 = vshrl.u32 %v440, 7
        %v442 = vsub.s32 2, %v441
        %v443 = vrot.slane %v433, %v442
        %v444 = vmul.f32 %v404, %v439
        %v445 = vmul.f32 %v404, %v443
        %v446 = vmul.f32 %v408, %v439
        %v447 = vmul.f32 %v408, %v443
        %v448 = vmul.f32 %v412, %v439
        %v449 = vmul.f32 %v412, %v443
        %v450 = vmul.f32 %v416, %v439
        %v451 = vmul.f32 %v416, %v443
        %v452 = vmul.f32 %v420, %v439
        %v453 = vmul.f32 %v420, %v443
        %v454 = vmul.f32 %v424, %v439
        %v455 = vmul.f32 %v424, %v443
        %v456 = vadd.f32 %v390, %v444
        %v457 = vadd.f32 %v391, %v445
        %v458 = vadd.f32 %v392, %v446
        %v459 = vadd.f32 %v393, %v447
        %v460 = vadd.f32 %v394, %v448
        %v461 = vadd.f32 %v395, %v449
        %v462 = vadd.f32 %v396, %v450
        %v463 = vadd.f32 %v397, %v451
        %v464 = vadd.f32 %v398, %v452
        %v465 = vadd.f32 %v399, %v453
        %v466 = vadd.f32 %v400, %v454
        %v467 = vadd.f32 %v401, %v455
        %468 = vst [vmem:[%s196] sm:$0xff] %v456
        %469 = vst [vmem:[%s196 + $0x8] sm:$0xff] %v457
        %470 = vst [vmem:[%s196 + $0x10] sm:$0xff] %v458
        %471 = vst [vmem:[%s196 + $0x18] sm:$0xff] %v459
        %472 = vst [vmem:[%s196 + $0x20] sm:$0xff] %v460
        %473 = vst [vmem:[%s196 + $0x28] sm:$0xff] %v461
        %474 = vst [vmem:[%s196 + $0x30] sm:$0xff] %v462
        %475 = vst [vmem:[%s196 + $0x38] sm:$0xff] %v463
        %476 = vst [vmem:[%s196 + $0x40] sm:$0xff] %v464
        %477 = vst [vmem:[%s196 + $0x48] sm:$0xff] %v465
        %478 = vst [vmem:[%s196 + $0x50] sm:$0xff] %v466
        %479 = vst [vmem:[%s196 + $0x58] sm:$0xff] %v467
        %480 = vst [vmem:[%s196 + $0x60] sm:$0xff] %v456
        %481 = vst [vmem:[%s196 + $0x68] sm:$0xff] %v457
        %482 = vst [vmem:[%s196 + $0x70] sm:$0xff] %v458
        %483 = vst [vmem:[%s196 + $0x78] sm:$0xff] %v459
        %484 = vst [vmem:[%s196 + $0x80] sm:$0xff] %v460
        %485 = vst [vmem:[%s196 + $0x88] sm:$0xff] %v461
        %486 = vst [vmem:[%s196 + $0x90] sm:$0xff] %v462
        %487 = vst [vmem:[%s196 + $0x98] sm:$0xff] %v463
        %488 = vst [vmem:[%s196 + $0xa0] sm:$0xff] %v464
        %489 = vst [vmem:[%s196 + $0xa8] sm:$0xff] %v465
        %490 = vst [vmem:[%s196 + $0xb0] sm:$0xff] %v466
        %491 = vst [vmem:[%s196 + $0xb8] sm:$0xff] %v467
        %s492 = sand.u32 %s106, 1
        %s493 = sand.u32 %s106, 1
        %s494 = smul.addr %s493, 192
        %s495 = scalar_lea.vmem [#allocation2], %s494
        // Predicated region
        $region33: #{model_forward.1} parent=31 // pred_check
          %p496 = pneg %p116
        $region34: #{model_forward.1} parent=31 // pred_check_branch
          %498 = sbr.rel (%p496) target = $region36
        $region35: #{model_forward.1} parent=31 // pred_region
          %s499 = smul.u32 2, %s19
          %s500 = ssub.s32 3, %s499
          %p501 = scmp.lt.s32.totalorder %s500, 2
          %s502 = scalar_select %p501, %s500, 2
          %s503 = smul.u32 1536, %s502
          %p504 = scmp.ne.s32.totalorder 0, %s503
          %s505 = smul.addr %s18, 36
          %s506 = sadd.s32 %s499, %s505
          %s507 = smul.addr %s506, 8
          %s508 = scalar_lea.vmem %s3, %s507
          %s509 = smul.u32 %s502, 8
          // Predicated region
          $region37: #{model_forward.1} parent=35 // pred_check
            %p510 = pneg %p504
          $region38: #{model_forward.1} parent=35 // pred_check_branch
            %512 = sbr.rel (%p510) target = $region40
          $region39: #{model_forward.1} parent=35 // pred_region
            %p513 = scmp.lt.u32.totalorder %s509, 8
            %p514 = pneg %p513
            // Predicated region
            $region41: #{model_forward.1} parent=39 // pred_check
              _
            $region42: #{model_forward.1} parent=39 // pred_check_branch
              %516 = sbr.rel (%p513) target = $region44
            $region43: #{model_forward.1} parent=39 // pred_region
              %s554 = sand.u32 %s509, 7
              %p555 = scmp.eq.s32.totalorder %s554, 0
              // Predicated region
              $region56: #{model_forward.1} parent=43 // pred_check
                %p556 = pneg %p555
              $region57: #{model_forward.1} parent=43 // pred_check_branch
                %558 = sbr.rel (%p556) target = $region59
              $region58: #{model_forward.1} parent=43 // pred_region
                %s559 = sshrl.u32 %s509, 3
                %s560 = sshrl.u32 %s559, 3
                // While loop
                $region60: #{model_forward.1} parent=58 // loop_pre_header
                  _
                $region61: #{model_forward.1} parent=58 // loop_header
                  %s564 = sphi 0, %s566
                  %p565 = scmp.ge.s32.totalorder %s564, %s560
                  %s569 = sphi 0, %s766
                  %s570 = sphi %s495, %s769
                  %s571 = sphi %s508, %s770
                $region62: #{model_forward.1} parent=58 // loop_header_branch
                  %568 = sbr.rel (%p565) target = $region66
                $region63: #{model_forward.1} parent=58 // loop_body
                  %v572 = vld [vmem:[%s570] sm:$0xff]
                  %573 = vst [vmem:[%s571] sm:$0xff] %v572
                  %v574 = vld [vmem:[%s570 + $0x8] sm:$0xff]
                  %575 = vst [vmem:[%s571 + $0x8] sm:$0xff] %v574
                  %v576 = vld [vmem:[%s570 + $0x10] sm:$0xff]
                  %577 = vst [vmem:[%s571 + $0x10] sm:$0xff] %v576
                  %v578 = vld [vmem:[%s570 + $0x18] sm:$0xff]
                  %579 = vst [vmem:[%s571 + $0x18] sm:$0xff] %v578
                  %v580 = vld [vmem:[%s570 + $0x20] sm:$0xff]
                  %581 = vst [vmem:[%s571 + $0x20] sm:$0xff] %v580
                  %v582 = vld [vmem:[%s570 + $0x28] sm:$0xff]
                  %583 = vst [vmem:[%s571 + $0x28] sm:$0xff] %v582
                  %v584 = vld [vmem:[%s570 + $0x30] sm:$0xff]
                  %585 = vst [vmem:[%s571 + $0x30] sm:$0xff] %v584
                  %v586 = vld [vmem:[%s570 + $0x38] sm:$0xff]
                  %587 = vst [vmem:[%s571 + $0x38] sm:$0xff] %v586
                  %v588 = vld [vmem:[%s570 + $0x10] sm:$0xff]
                  %589 = vst [vmem:[%s571 + $0x18] sm:$0xff] %v588
                  %v590 = vld [vmem:[%s570 + $0x18] sm:$0xff]
                  %591 = vst [vmem:[%s571 + $0x20] sm:$0xff] %v590
                  %v592 = vld [vmem:[%s570 + $0x20] sm:$0xff]
                  %593 = vst [vmem:[%s571 + $0x28] sm:$0xff] %v592
                  %v594 = vld [vmem:[%s570 + $0x28] sm:$0xff]
                  %595 = vst [vmem:[%s571 + $0x30] sm:$0xff] %v594
                  %v596 = vld [vmem:[%s570 + $0x30] sm:$0xff]
                  %597 = vst [vmem:[%s571 + $0x38] sm:$0xff] %v596
                  %v598 = vld [vmem:[%s570 + $0x38] sm:$0xff]
                  %599 = vst [vmem:[%s571 + $0x40] sm:$0xff] %v598
                  %v600 = vld [vmem:[%s570 + $0x40] sm:$0xff]
                  %601 = vst [vmem:[%s571 + $0x48] sm:$0xff] %v600
                  %v602 = vld [vmem:[%s570 + $0x48] sm:$0xff]
                  %603 = vst [vmem:[%s571 + $0x50] sm:$0xff] %v602
                  %v604 = vld [vmem:[%s570 + $0x20] sm:$0xff]
                  %605 = vst [vmem:[%s571 + $0x30] sm:$0xff] %v604
                  %v606 = vld [vmem:[%s570 + $0x28] sm:$0xff]
                  %607 = vst [vmem:[%s571 + $0x38] sm:$0xff] %v606
                  %v608 = vld [vmem:[%s570 + $0x30] sm:$0xff]
                  %609 = vst [vmem:[%s571 + $0x40] sm:$0xff] %v608
                  %v610 = vld [vmem:[%s570 + $0x38] sm:$0xff]
                  %611 = vst [vmem:[%s571 + $0x48] sm:$0xff] %v610
                  %v612 = vld [vmem:[%s570 + $0x40] sm:$0xff]
                  %613 = vst [vmem:[%s571 + $0x50] sm:$0xff] %v612
                  %v614 = vld [vmem:[%s570 + $0x48] sm:$0xff]
                  %615 = vst [vmem:[%s571 + $0x58] sm:$0xff] %v614
                  %v616 = vld [vmem:[%s570 + $0x50] sm:$0xff]
                  %617 = vst [vmem:[%s571 + $0x60] sm:$0xff] %v616
                  %v618 = vld [vmem:[%s570 + $0x58] sm:$0xff]
                  %619 = vst [vmem:[%s571 + $0x68] sm:$0xff] %v618
                  %v620 = vld [vmem:[%s570 + $0x30] sm:$0xff]
                  %621 = vst [vmem:[%s571 + $0x48] sm:$0xff] %v620
                  %v622 = vld [vmem:[%s570 + $0x38] sm:$0xff]
                  %623 = vst [vmem:[%s571 + $0x50] sm:$0xff] %v622
                  %v624 = vld [vmem:[%s570 + $0x40] sm:$0xff]
                  %625 = vst [vmem:[%s571 + $0x58] sm:$0xff] %v624
                  %v626 = vld [vmem:[%s570 + $0x48] sm:$0xff]
                  %627 = vst [vmem:[%s571 + $0x60] sm:$0xff] %v626
                  %v628 = vld [vmem:[%s570 + $0x50] sm:$0xff]
                  %629 = vst [vmem:[%s571 + $0x68] sm:$0xff] %v628
                  %v630 = vld [vmem:[%s570 + $0x58] sm:$0xff]
                  %631 = vst [vmem:[%s571 + $0x70] sm:$0xff] %v630
                  %v632 = vld [vmem:[%s570 + $0x60] sm:$0xff]
                  %633 = vst [vmem:[%s571 + $0x78] sm:$0xff] %v632
                  %v634 = vld [vmem:[%s570 + $0x68] sm:$0xff]
                  %635 = vst [vmem:[%s571 + $0x80] sm:$0xff] %v634
                  %v636 = vld [vmem:[%s570 + $0x40] sm:$0xff]
                  %637 = vst [vmem:[%s571 + $0x60] sm:$0xff] %v636
                  %v638 = vld [vmem:[%s570 + $0x48] sm:$0xff]
                  %639 = vst [vmem:[%s571 + $0x68] sm:$0xff] %v638
                  %v640 = vld [vmem:[%s570 + $0x50] sm:$0xff]
                  %641 = vst [vmem:[%s571 + $0x70] sm:$0xff] %v640
                  %v642 = vld [vmem:[%s570 + $0x58] sm:$0xff]
                  %643 = vst [vmem:[%s571 + $0x78] sm:$0xff] %v642
                  %v644 = vld [vmem:[%s570 + $0x60] sm:$0xff]
                  %645 = vst [vmem:[%s571 + $0x80] sm:$0xff] %v644
                  %v646 = vld [vmem:[%s570 + $0x68] sm:$0xff]
                  %647 = vst [vmem:[%s571 + $0x88] sm:$0xff] %v646
                  %v648 = vld [vmem:[%s570 + $0x70] sm:$0xff]
                  %649 = vst [vmem:[%s571 + $0x90] sm:$0xff] %v648
                  %v650 = vld [vmem:[%s570 + $0x78] sm:$0xff]
                  %651 = vst [vmem:[%s571 + $0x98] sm:$0xff] %v650
                  %v652 = vld [vmem:[%s570 + $0x50] sm:$0xff]
                  %653 = vst [vmem:[%s571 + $0x78] sm:$0xff] %v652
                  %v654 = vld [vmem:[%s570 + $0x58] sm:$0xff]
                  %655 = vst [vmem:[%s571 + $0x80] sm:$0xff] %v654
                  %v656 = vld [vmem:[%s570 + $0x60] sm:$0xff]
                  %657 = vst [vmem:[%s571 + $0x88] sm:$0xff] %v656
                  %v658 = vld [vmem:[%s570 + $0x68] sm:$0xff]
                  %659 = vst [vmem:[%s571 + $0x90] sm:$0xff] %v658
                  %v660 = vld [vmem:[%s570 + $0x70] sm:$0xff]
                  %661 = vst [vmem:[%s571 + $0x98] sm:$0xff] %v660
                  %v662 = vld [vmem:[%s570 + $0x78] sm:$0xff]
                  %663 = vst [vmem:[%s571 + $0xa0] sm:$0xff] %v662
                  %v664 = vld [vmem:[%s570 + $0x80] sm:$0xff]
                  %665 = vst [vmem:[%s571 + $0xa8] sm:$0xff] %v664
                  %v666 = vld [vmem:[%s570 + $0x88] sm:$0xff]
                  %667 = vst [vmem:[%s571 + $0xb0] sm:$0xff] %v666
                  %v668 = vld [vmem:[%s570 + $0x60] sm:$0xff]
                  %669 = vst [vmem:[%s571 + $0x90] sm:$0xff] %v668
                  %v670 = vld [vmem:[%s570 + $0x68] sm:$0xff]
                  %671 = vst [vmem:[%s571 + $0x98] sm:$0xff] %v670
                  %v672 = vld [vmem:[%s570 + $0x70] sm:$0xff]
                  %673 = vst [vmem:[%s571 + $0xa0] sm:$0xff] %v672
                  %v674 = vld [vmem:[%s570 + $0x78] sm:$0xff]
                  %675 = vst [vmem:[%s571 + $0xa8] sm:$0xff] %v674
                  %v676 = vld [vmem:[%s570 + $0x80] sm:$0xff]
                  %677 = vst [vmem:[%s571 + $0xb0] sm:$0xff] %v676
                  %v678 = vld [vmem:[%s570 + $0x88] sm:$0xff]
                  %679 = vst [vmem:[%s571 + $0xb8] sm:$0xff] %v678
                  %v680 = vld [vmem:[%s570 + $0x90] sm:$0xff]
                  %681 = vst [vmem:[%s571 + $0xc0] sm:$0xff] %v680
                  %v682 = vld [vmem:[%s570 + $0x98] sm:$0xff]
                  %683 = vst [vmem:[%s571 + $0xc8] sm:$0xff] %v682
                  %v684 = vld [vmem:[%s570 + $0x70] sm:$0xff]
                  %685 = vst [vmem:[%s571 + $0xa8] sm:$0xff] %v684
                  %v686 = vld [vmem:[%s570 + $0x78] sm:$0xff]
                  %687 = vst [vmem:[%s571 + $0xb0] sm:$0xff] %v686
                  %v688 = vld [vmem:[%s570 + $0x80] sm:$0xff]
                  %689 = vst [vmem:[%s571 + $0xb8] sm:$0xff] %v688
                  %v690 = vld [vmem:[%s570 + $0x88] sm:$0xff]
                  %691 = vst [vmem:[%s571 + $0xc0] sm:$0xff] %v690
                  %v692 = vld [vmem:[%s570 + $0x90] sm:$0xff]
                  %693 = vst [vmem:[%s571 + $0xc8] sm:$0xff] %v692
                  %v694 = vld [vmem:[%s570 + $0x98] sm:$0xff]
                  %695 = vst [vmem:[%s571 + $0xd0] sm:$0xff] %v694
                  %v696 = vld [vmem:[%s570 + $0xa0] sm:$0xff]
                  %697 = vst [vmem:[%s571 + $0xd8] sm:$0xff] %v696
                  %v698 = vld [vmem:[%s570 + $0xa8] sm:$0xff]
                  %699 = vst [vmem:[%s571 + $0xe0] sm:$0xff] %v698
                  %v700 = vld [vmem:[%s570 + $0x80] sm:$0xff]
                  %701 = vst [vmem:[%s571 + $0xc0] sm:$0xff] %v700
                  %v702 = vld [vmem:[%s570 + $0x88] sm:$0xff]
                  %703 = vst [vmem:[%s571 + $0xc8] sm:$0xff] %v702
                  %v704 = vld [vmem:[%s570 + $0x90] sm:$0xff]
                  %705 = vst [vmem:[%s571 + $0xd0] sm:$0xff] %v704
                  %v706 = vld [vmem:[%s570 + $0x98] sm:$0xff]
                  %707 = vst [vmem:[%s571 + $0xd8] sm:$0xff] %v706
                  %v708 = vld [vmem:[%s570 + $0xa0] sm:$0xff]
                  %709 = vst [vmem:[%s571 + $0xe0] sm:$0xff] %v708
                  %v710 = vld [vmem:[%s570 + $0xa8] sm:$0xff]
                  %711 = vst [vmem:[%s571 + $0xe8] sm:$0xff] %v710
                  %v712 = vld [vmem:[%s570 + $0xb0] sm:$0xff]
                  %713 = vst [vmem:[%s571 + $0xf0] sm:$0xff] %v712
                  %v714 = vld [vmem:[%s570 + $0xb8] sm:$0xff]
                  %715 = vst [vmem:[%s571 + $0xf8] sm:$0xff] %v714
                  %v716 = vld [vmem:[%s570 + $0x90] sm:$0xff]
                  %717 = vst [vmem:[%s571 + $0xd8] sm:$0xff] %v716
                  %v718 = vld [vmem:[%s570 + $0x98] sm:$0xff]
                  %719 = vst [vmem:[%s571 + $0xe0] sm:$0xff] %v718
                  %v720 = vld [vmem:[%s570 + $0xa0] sm:$0xff]
                  %721 = vst [vmem:[%s571 + $0xe8] sm:$0xff] %v720
                  %v722 = vld [vmem:[%s570 + $0xa8] sm:$0xff]
                  %723 = vst [vmem:[%s571 + $0xf0] sm:$0xff] %v722
                  %v724 = vld [vmem:[%s570 + $0xb0] sm:$0xff]
                  %725 = vst [vmem:[%s571 + $0xf8] sm:$0xff] %v724
                  %v726 = vld [vmem:[%s570 + $0xb8] sm:$0xff]
                  %727 = vst [vmem:[%s571 + $0x100] sm:$0xff] %v726
                  %v728 = vld [vmem:[%s570 + $0xc0] sm:$0xff]
                  %729 = vst [vmem:[%s571 + $0x108] sm:$0xff] %v728
                  %v730 = vld [vmem:[%s570 + $0xc8] sm:$0xff]
                  %731 = vst [vmem:[%s571 + $0x110] sm:$0xff] %v730
                  %v732 = vld [vmem:[%s570 + $0xa0] sm:$0xff]
                  %733 = vst [vmem:[%s571 + $0xf0] sm:$0xff] %v732
                  %v734 = vld [vmem:[%s570 + $0xa8] sm:$0xff]
                  %735 = vst [vmem:[%s571 + $0xf8] sm:$0xff] %v734
                  %v736 = vld [vmem:[%s570 + $0xb0] sm:$0xff]
                  %737 = vst [vmem:[%s571 + $0x100] sm:$0xff] %v736
                  %v738 = vld [vmem:[%s570 + $0xb8] sm:$0xff]
                  %739 = vst [vmem:[%s571 + $0x108] sm:$0xff] %v738
                  %v740 = vld [vmem:[%s570 + $0xc0] sm:$0xff]
                  %741 = vst [vmem:[%s571 + $0x110] sm:$0xff] %v740
                  %v742 = vld [vmem:[%s570 + $0xc8] sm:$0xff]
                  %743 = vst [vmem:[%s571 + $0x118] sm:$0xff] %v742
                  %v744 = vld [vmem:[%s570 + $0xd0] sm:$0xff]
                  %745 = vst [vmem:[%s571 + $0x120] sm:$0xff] %v744
                  %v746 = vld [vmem:[%s570 + $0xd8] sm:$0xff]
                  %747 = vst [vmem:[%s571 + $0x128] sm:$0xff] %v746
                  %v748 = vld [vmem:[%s570 + $0xb0] sm:$0xff]
                  %749 = vst [vmem:[%s571 + $0x108] sm:$0xff] %v748
                  %v750 = vld [vmem:[%s570 + $0xb8] sm:$0xff]
                  %751 = vst [vmem:[%s571 + $0x110] sm:$0xff] %v750
                  %v752 = vld [vmem:[%s570 + $0xc0] sm:$0xff]
                  %753 = vst [vmem:[%s571 + $0x118] sm:$0xff] %v752
                  %v754 = vld [vmem:[%s570 + $0xc8] sm:$0xff]
                  %755 = vst [vmem:[%s571 + $0x120] sm:$0xff] %v754
                  %v756 = vld [vmem:[%s570 + $0xd0] sm:$0xff]
                  %757 = vst [vmem:[%s571 + $0x128] sm:$0xff] %v756
                  %v758 = vld [vmem:[%s570 + $0xd8] sm:$0xff]
                  %759 = vst [vmem:[%s571 + $0x130] sm:$0xff] %v758
                  %v760 = vld [vmem:[%s570 + $0xe0] sm:$0xff]
                  %761 = vst [vmem:[%s571 + $0x138] sm:$0xff] %v760
                  %v762 = vld [vmem:[%s570 + $0xe8] sm:$0xff]
                  %763 = vst [vmem:[%s571 + $0x140] sm:$0xff] %v762
                  %s764 = sadd.s32 1, %s569
                  %p765 = scmp.ge.s32.totalorder %s764, %s560
                  %s766 = scalar_select %p765, 0, %s764
                  %s767 = smul.u32 %s766, 64
                  %s768 = smul.u32 %s766, 64
                  %s769 = scalar_lea.vmem %s495, %s767 [#allocation2]
                  %s770 = scalar_lea.vmem %s508, %s768
                $region64: #{model_forward.1} parent=58 // loop_footer
                  %s566 = sadd.s32 %s564, 1
                $region65: #{model_forward.1} parent=58 // loop_footer_branch
                  %563 = sbr.rel target = $region61
                $region66: #{model_forward.1} parent=58 // loop_exit
                  _
                %s771 = sshrl.u32 %s559, 3
                %s772 = sand.u32 %s559, 7
                %s773 = smul.u32 %s771, 8
                %s774 = smul.u32 128, %s773
                %s775 = sshra.s32 %s774, 4
                %s776 = scalar_lea.vmem %s495, %s775 [#allocation2]
                %s777 = smul.u32 128, %s773
                %s778 = sshra.s32 %s777, 4
                %s779 = scalar_lea.vmem %s508, %s778
                // While loop
                $region67: #{model_forward.1} parent=58 // loop_pre_header
                  _
                $region68: #{model_forward.1} parent=58 // loop_header
                  %s783 = sphi 0, %s785
                  %p784 = scmp.ge.s32.totalorder %s783, %s772
                  %s788 = sphi 0, %s817
                  %s789 = sphi %s776, %s820
                  %s790 = sphi %s779, %s821
                $region69: #{model_forward.1} parent=58 // loop_header_branch
                  %787 = sbr.rel (%p784) target = $region73
                $region70: #{model_forward.1} parent=58 // loop_body
                  %v791 = vld [vmem:[%s789] sm:$0xff]
                  %792 = vst [vmem:[%s790] sm:$0xff] %v791
                  %v793 = vld [vmem:[%s789 + $0x10] sm:$0xff]
                  %794 = vst [vmem:[%s790 + $0x18] sm:$0xff] %v793
                  %v795 = vld [vmem:[%s789 + $0x20] sm:$0xff]
                  %796 = vst [vmem:[%s790 + $0x30] sm:$0xff] %v795
                  %v797 = vld [vmem:[%s789 + $0x30] sm:$0xff]
                  %798 = vst [vmem:[%s790 + $0x48] sm:$0xff] %v797
                  %v799 = vld [vmem:[%s789 + $0x40] sm:$0xff]
                  %800 = vst [vmem:[%s790 + $0x60] sm:$0xff] %v799
                  %v801 = vld [vmem:[%s789 + $0x50] sm:$0xff]
                  %802 = vst [vmem:[%s790 + $0x78] sm:$0xff] %v801
                  %v803 = vld [vmem:[%s789 + $0x60] sm:$0xff]
                  %804 = vst [vmem:[%s790 + $0x90] sm:$0xff] %v803
                  %v805 = vld [vmem:[%s789 + $0x70] sm:$0xff]
                  %806 = vst [vmem:[%s790 + $0xa8] sm:$0xff] %v805
                  %v807 = vld [vmem:[%s789 + $0x80] sm:$0xff]
                  %808 = vst [vmem:[%s790 + $0xc0] sm:$0xff] %v807
                  %v809 = vld [vmem:[%s789 + $0x90] sm:$0xff]
                  %810 = vst [vmem:[%s790 + $0xd8] sm:$0xff] %v809
                  %v811 = vld [vmem:[%s789 + $0xa0] sm:$0xff]
                  %812 = vst [vmem:[%s790 + $0xf0] sm:$0xff] %v811
                  %v813 = vld [vmem:[%s789 + $0xb0] sm:$0xff]
                  %814 = vst [vmem:[%s790 + $0x108] sm:$0xff] %v813
                  %s815 = sadd.s32 1, %s788
                  %p816 = scmp.ge.s32.totalorder %s815, %s772
                  %s817 = scalar_select %p816, 0, %s815
                  %s818 = smul.u32 %s817, 8
                  %s819 = smul.u32 %s817, 8
                  %s820 = scalar_lea.vmem %s776, %s818 [#allocation2]
                  %s821 = scalar_lea.vmem %s779, %s819
                $region71: #{model_forward.1} parent=58 // loop_footer
                  %s785 = sadd.s32 %s783, 1
                $region72: #{model_forward.1} parent=58 // loop_footer_branch
                  %782 = sbr.rel target = $region68
                $region73: #{model_forward.1} parent=58 // loop_exit
                  _
              $region59: #{model_forward.1} parent=43 // pred_fallthru
                _
              %p822 = pneg %p555
              // Predicated region
              $region74: #{model_forward.1} parent=43 // pred_check
                _
              $region75: #{model_forward.1} parent=43 // pred_check_branch
                %824 = sbr.rel (%p555) target = $region77
              $region76: #{model_forward.1} parent=43 // pred_region
                %s825 = sand.u32 %s509, 7
                %s826 = ssub.s32 %s509, %s825
                %s827 = scalar_lea.vmem %s495, %s826 [#allocation2]
                %s828 = ssub.s32 %s509, %s825
                %s829 = scalar_lea.vmem %s508, %s828
                %s830 = sshrl.u32 %s509, 3
                %s831 = sshrl.u32 %s830, 3
                // While loop
                $region78: #{model_forward.1} parent=76 // loop_pre_header
                  _
                $region79: #{model_forward.1} parent=76 // loop_header
                  %s835 = sphi 0, %s837
                  %p836 = scmp.ge.s32.totalorder %s835, %s831
                  %s840 = sphi 0, %s1037
                  %s841 = sphi %s495, %s1040
                  %s842 = sphi %s508, %s1041
                $region80: #{model_forward.1} parent=76 // loop_header_branch
                  %839 = sbr.rel (%p836) target = $region84
                $region81: #{model_forward.1} parent=76 // loop_body
                  %v843 = vld [vmem:[%s841] sm:$0xff]
                  %844 = vst [vmem:[%s842] sm:$0xff] %v843
                  %v845 = vld [vmem:[%s841 + $0x8] sm:$0xff]
                  %846 = vst [vmem:[%s842 + $0x8] sm:$0xff] %v845
                  %v847 = vld [vmem:[%s841 + $0x10] sm:$0xff]
                  %848 = vst [vmem:[%s842 + $0x10] sm:$0xff] %v847
                  %v849 = vld [vmem:[%s841 + $0x18] sm:$0xff]
                  %850 = vst [vmem:[%s842 + $0x18] sm:$0xff] %v849
                  %v851 = vld [vmem:[%s841 + $0x20] sm:$0xff]
                  %852 = vst [vmem:[%s842 + $0x20] sm:$0xff] %v851
                  %v853 = vld [vmem:[%s841 + $0x28] sm:$0xff]
                  %854 = vst [vmem:[%s842 + $0x28] sm:$0xff] %v853
                  %v855 = vld [vmem:[%s841 + $0x30] sm:$0xff]
                  %856 = vst [vmem:[%s842 + $0x30] sm:$0xff] %v855
                  %v857 = vld [vmem:[%s841 + $0x38] sm:$0xff]
                  %858 = vst [vmem:[%s842 + $0x38] sm:$0xff] %v857
                  %v859 = vld [vmem:[%s841 + $0x10] sm:$0xff]
                  %860 = vst [vmem:[%s842 + $0x18] sm:$0xff] %v859
                  %v861 = vld [vmem:[%s841 + $0x18] sm:$0xff]
                  %862 = vst [vmem:[%s842 + $0x20] sm:$0xff] %v861
                  %v863 = vld [vmem:[%s841 + $0x20] sm:$0xff]
                  %864 = vst [vmem:[%s842 + $0x28] sm:$0xff] %v863
                  %v865 = vld [vmem:[%s841 + $0x28] sm:$0xff]
                  %866 = vst [vmem:[%s842 + $0x30] sm:$0xff] %v865
                  %v867 = vld [vmem:[%s841 + $0x30] sm:$0xff]
                  %868 = vst [vmem:[%s842 + $0x38] sm:$0xff] %v867
                  %v869 = vld [vmem:[%s841 + $0x38] sm:$0xff]
                  %870 = vst [vmem:[%s842 + $0x40] sm:$0xff] %v869
                  %v871 = vld [vmem:[%s841 + $0x40] sm:$0xff]
                  %872 = vst [vmem:[%s842 + $0x48] sm:$0xff] %v871
                  %v873 = vld [vmem:[%s841 + $0x48] sm:$0xff]
                  %874 = vst [vmem:[%s842 + $0x50] sm:$0xff] %v873
                  %v875 = vld [vmem:[%s841 + $0x20] sm:$0xff]
                  %876 = vst [vmem:[%s842 + $0x30] sm:$0xff] %v875
                  %v877 = vld [vmem:[%s841 + $0x28] sm:$0xff]
                  %878 = vst [vmem:[%s842 + $0x38] sm:$0xff] %v877
                  %v879 = vld [vmem:[%s841 + $0x30] sm:$0xff]
                  %880 = vst [vmem:[%s842 + $0x40] sm:$0xff] %v879
                  %v881 = vld [vmem:[%s841 + $0x38] sm:$0xff]
                  %882 = vst [vmem:[%s842 + $0x48] sm:$0xff] %v881
                  %v883 = vld [vmem:[%s841 + $0x40] sm:$0xff]
                  %884 = vst [vmem:[%s842 + $0x50] sm:$0xff] %v883
                  %v885 = vld [vmem:[%s841 + $0x48] sm:$0xff]
                  %886 = vst [vmem:[%s842 + $0x58] sm:$0xff] %v885
                  %v887 = vld [vmem:[%s841 + $0x50] sm:$0xff]
                  %888 = vst [vmem:[%s842 + $0x60] sm:$0xff] %v887
                  %v889 = vld [vmem:[%s841 + $0x58] sm:$0xff]
                  %890 = vst [vmem:[%s842 + $0x68] sm:$0xff] %v889
                  %v891 = vld [vmem:[%s841 + $0x30] sm:$0xff]
                  %892 = vst [vmem:[%s842 + $0x48] sm:$0xff] %v891
                  %v893 = vld [vmem:[%s841 + $0x38] sm:$0xff]
                  %894 = vst [vmem:[%s842 + $0x50] sm:$0xff] %v893
                  %v895 = vld [vmem:[%s841 + $0x40] sm:$0xff]
                  %896 = vst [vmem:[%s842 + $0x58] sm:$0xff] %v895
                  %v897 = vld [vmem:[%s841 + $0x48] sm:$0xff]
                  %898 = vst [vmem:[%s842 + $0x60] sm:$0xff] %v897
                  %v899 = vld [vmem:[%s841 + $0x50] sm:$0xff]
                  %900 = vst [vmem:[%s842 + $0x68] sm:$0xff] %v899
                  %v901 = vld [vmem:[%s841 + $0x58] sm:$0xff]
                  %902 = vst [vmem:[%s842 + $0x70] sm:$0xff] %v901
                  %v903 = vld [vmem:[%s841 + $0x60] sm:$0xff]
                  %904 = vst [vmem:[%s842 + $0x78] sm:$0xff] %v903
                  %v905 = vld [vmem:[%s841 + $0x68] sm:$0xff]
                  %906 = vst [vmem:[%s842 + $0x80] sm:$0xff] %v905
                  %v907 = vld [vmem:[%s841 + $0x40] sm:$0xff]
                  %908 = vst [vmem:[%s842 + $0x60] sm:$0xff] %v907
                  %v909 = vld [vmem:[%s841 + $0x48] sm:$0xff]
                  %910 = vst [vmem:[%s842 + $0x68] sm:$0xff] %v909
                  %v911 = vld [vmem:[%s841 + $0x50] sm:$0xff]
                  %912 = vst [vmem:[%s842 + $0x70] sm:$0xff] %v911
                  %v913 = vld [vmem:[%s841 + $0x58] sm:$0xff]
                  %914 = vst [vmem:[%s842 + $0x78] sm:$0xff] %v913
                  %v915 = vld [vmem:[%s841 + $0x60] sm:$0xff]
                  %916 = vst [vmem:[%s842 + $0x80] sm:$0xff] %v915
                  %v917 = vld [vmem:[%s841 + $0x68] sm:$0xff]
                  %918 = vst [vmem:[%s842 + $0x88] sm:$0xff] %v917
                  %v919 = vld [vmem:[%s841 + $0x70] sm:$0xff]
                  %920 = vst [vmem:[%s842 + $0x90] sm:$0xff] %v919
                  %v921 = vld [vmem:[%s841 + $0x78] sm:$0xff]
                  %922 = vst [vmem:[%s842 + $0x98] sm:$0xff] %v921
                  %v923 = vld [vmem:[%s841 + $0x50] sm:$0xff]
                  %924 = vst [vmem:[%s842 + $0x78] sm:$0xff] %v923
                  %v925 = vld [vmem:[%s841 + $0x58] sm:$0xff]
                  %926 = vst [vmem:[%s842 + $0x80] sm:$0xff] %v925
                  %v927 = vld [vmem:[%s841 + $0x60] sm:$0xff]
                  %928 = vst [vmem:[%s842 + $0x88] sm:$0xff] %v927
                  %v929 = vld [vmem:[%s841 + $0x68] sm:$0xff]
                  %930 = vst [vmem:[%s842 + $0x90] sm:$0xff] %v929
                  %v931 = vld [vmem:[%s841 + $0x70] sm:$0xff]
                  %932 = vst [vmem:[%s842 + $0x98] sm:$0xff] %v931
                  %v933 = vld [vmem:[%s841 + $0x78] sm:$0xff]
                  %934 = vst [vmem:[%s842 + $0xa0] sm:$0xff] %v933
                  %v935 = vld [vmem:[%s841 + $0x80] sm:$0xff]
                  %936 = vst [vmem:[%s842 + $0xa8] sm:$0xff] %v935
                  %v937 = vld [vmem:[%s841 + $0x88] sm:$0xff]
                  %938 = vst [vmem:[%s842 + $0xb0] sm:$0xff] %v937
                  %v939 = vld [vmem:[%s841 + $0x60] sm:$0xff]
                  %940 = vst [vmem:[%s842 + $0x90] sm:$0xff] %v939
                  %v941 = vld [vmem:[%s841 + $0x68] sm:$0xff]
                  %942 = vst [vmem:[%s842 + $0x98] sm:$0xff] %v941
                  %v943 = vld [vmem:[%s841 + $0x70] sm:$0xff]
                  %944 = vst [vmem:[%s842 + $0xa0] sm:$0xff] %v943
                  %v945 = vld [vmem:[%s841 + $0x78] sm:$0xff]
                  %946 = vst [vmem:[%s842 + $0xa8] sm:$0xff] %v945
                  %v947 = vld [vmem:[%s841 + $0x80] sm:$0xff]
                  %948 = vst [vmem:[%s842 + $0xb0] sm:$0xff] %v947
                  %v949 = vld [vmem:[%s841 + $0x88] sm:$0xff]
                  %950 = vst [vmem:[%s842 + $0xb8] sm:$0xff] %v949
                  %v951 = vld [vmem:[%s841 + $0x90] sm:$0xff]
                  %952 = vst [vmem:[%s842 + $0xc0] sm:$0xff] %v951
                  %v953 = vld [vmem:[%s841 + $0x98] sm:$0xff]
                  %954 = vst [vmem:[%s842 + $0xc8] sm:$0xff] %v953
                  %v955 = vld [vmem:[%s841 + $0x70] sm:$0xff]
                  %956 = vst [vmem:[%s842 + $0xa8] sm:$0xff] %v955
                  %v957 = vld [vmem:[%s841 + $0x78] sm:$0xff]
                  %958 = vst [vmem:[%s842 + $0xb0] sm:$0xff] %v957
                  %v959 = vld [vmem:[%s841 + $0x80] sm:$0xff]
                  %960 = vst [vmem:[%s842 + $0xb8] sm:$0xff] %v959
                  %v961 = vld [vmem:[%s841 + $0x88] sm:$0xff]
                  %962 = vst [vmem:[%s842 + $0xc0] sm:$0xff] %v961
                  %v963 = vld [vmem:[%s841 + $0x90] sm:$0xff]
                  %964 = vst [vmem:[%s842 + $0xc8] sm:$0xff] %v963
                  %v965 = vld [vmem:[%s841 + $0x98] sm:$0xff]
                  %966 = vst [vmem:[%s842 + $0xd0] sm:$0xff] %v965
                  %v967 = vld [vmem:[%s841 + $0xa0] sm:$0xff]
                  %968 = vst [vmem:[%s842 + $0xd8] sm:$0xff] %v967
                  %v969 = vld [vmem:[%s841 + $0xa8] sm:$0xff]
                  %970 = vst [vmem:[%s842 + $0xe0] sm:$0xff] %v969
                  %v971 = vld [vmem:[%s841 + $0x80] sm:$0xff]
                  %972 = vst [vmem:[%s842 + $0xc0] sm:$0xff] %v971
                  %v973 = vld [vmem:[%s841 + $0x88] sm:$0xff]
                  %974 = vst [vmem:[%s842 + $0xc8] sm:$0xff] %v973
                  %v975 = vld [vmem:[%s841 + $0x90] sm:$0xff]
                  %976 = vst [vmem:[%s842 + $0xd0] sm:$0xff] %v975
                  %v977 = vld [vmem:[%s841 + $0x98] sm:$0xff]
                  %978 = vst [vmem:[%s842 + $0xd8] sm:$0xff] %v977
                  %v979 = vld [vmem:[%s841 + $0xa0] sm:$0xff]
                  %980 = vst [vmem:[%s842 + $0xe0] sm:$0xff] %v979
                  %v981 = vld [vmem:[%s841 + $0xa8] sm:$0xff]
                  %982 = vst [vmem:[%s842 + $0xe8] sm:$0xff] %v981
                  %v983 = vld [vmem:[%s841 + $0xb0] sm:$0xff]
                  %984 = vst [vmem:[%s842 + $0xf0] sm:$0xff] %v983
                  %v985 = vld [vmem:[%s841 + $0xb8] sm:$0xff]
                  %986 = vst [vmem:[%s842 + $0xf8] sm:$0xff] %v985
                  %v987 = vld [vmem:[%s841 + $0x90] sm:$0xff]
                  %988 = vst [vmem:[%s842 + $0xd8] sm:$0xff] %v987
                  %v989 = vld [vmem:[%s841 + $0x98] sm:$0xff]
                  %990 = vst [vmem:[%s842 + $0xe0] sm:$0xff] %v989
                  %v991 = vld [vmem:[%s841 + $0xa0] sm:$0xff]
                  %992 = vst [vmem:[%s842 + $0xe8] sm:$0xff] %v991
                  %v993 = vld [vmem:[%s841 + $0xa8] sm:$0xff]
                  %994 = vst [vmem:[%s842 + $0xf0] sm:$0xff] %v993
                  %v995 = vld [vmem:[%s841 + $0xb0] sm:$0xff]
                  %996 = vst [vmem:[%s842 + $0xf8] sm:$0xff] %v995
                  %v997 = vld [vmem:[%s841 + $0xb8] sm:$0xff]
                  %998 = vst [vmem:[%s842 + $0x100] sm:$0xff] %v997
                  %v999 = vld [vmem:[%s841 + $0xc0] sm:$0xff]
                  %1000 = vst [vmem:[%s842 + $0x108] sm:$0xff] %v999
                  %v1001 = vld [vmem:[%s841 + $0xc8] sm:$0xff]
                  %1002 = vst [vmem:[%s842 + $0x110] sm:$0xff] %v1001
                  %v1003 = vld [vmem:[%s841 + $0xa0] sm:$0xff]
                  %1004 = vst [vmem:[%s842 + $0xf0] sm:$0xff] %v1003
                  %v1005 = vld [vmem:[%s841 + $0xa8] sm:$0xff]
                  %1006 = vst [vmem:[%s842 + $0xf8] sm:$0xff] %v1005
                  %v1007 = vld [vmem:[%s841 + $0xb0] sm:$0xff]
                  %1008 = vst [vmem:[%s842 + $0x100] sm:$0xff] %v1007
                  %v1009 = vld [vmem:[%s841 + $0xb8] sm:$0xff]
                  %1010 = vst [vmem:[%s842 + $0x108] sm:$0xff] %v1009
                  %v1011 = vld [vmem:[%s841 + $0xc0] sm:$0xff]
                  %1012 = vst [vmem:[%s842 + $0x110] sm:$0xff] %v1011
                  %v1013 = vld [vmem:[%s841 + $0xc8] sm:$0xff]
                  %1014 = vst [vmem:[%s842 + $0x118] sm:$0xff] %v1013
                  %v1015 = vld [vmem:[%s841 + $0xd0] sm:$0xff]
                  %1016 = vst [vmem:[%s842 + $0x120] sm:$0xff] %v1015
                  %v1017 = vld [vmem:[%s841 + $0xd8] sm:$0xff]
                  %1018 = vst [vmem:[%s842 + $0x128] sm:$0xff] %v1017
                  %v1019 = vld [vmem:[%s841 + $0xb0] sm:$0xff]
                  %1020 = vst [vmem:[%s842 + $0x108] sm:$0xff] %v1019
                  %v1021 = vld [vmem:[%s841 + $0xb8] sm:$0xff]
                  %1022 = vst [vmem:[%s842 + $0x110] sm:$0xff] %v1021
                  %v1023 = vld [vmem:[%s841 + $0xc0] sm:$0xff]
                  %1024 = vst [vmem:[%s842 + $0x118] sm:$0xff] %v1023
                  %v1025 = vld [vmem:[%s841 + $0xc8] sm:$0xff]
                  %1026 = vst [vmem:[%s842 + $0x120] sm:$0xff] %v1025
                  %v1027 = vld [vmem:[%s841 + $0xd0] sm:$0xff]
                  %1028 = vst [vmem:[%s842 + $0x128] sm:$0xff] %v1027
                  %v1029 = vld [vmem:[%s841 + $0xd8] sm:$0xff]
                  %1030 = vst [vmem:[%s842 + $0x130] sm:$0xff] %v1029
                  %v1031 = vld [vmem:[%s841 + $0xe0] sm:$0xff]
                  %1032 = vst [vmem:[%s842 + $0x138] sm:$0xff] %v1031
                  %v1033 = vld [vmem:[%s841 + $0xe8] sm:$0xff]
                  %1034 = vst [vmem:[%s842 + $0x140] sm:$0xff] %v1033
                  %s1035 = sadd.s32 1, %s840
                  %p1036 = scmp.ge.s32.totalorder %s1035, %s831
                  %s1037 = scalar_select %p1036, 0, %s1035
                  %s1038 = smul.u32 %s1037, 64
                  %s1039 = smul.u32 %s1037, 64
                  %s1040 = scalar_lea.vmem %s495, %s1038 [#allocation2]
                  %s1041 = scalar_lea.vmem %s508, %s1039
                $region82: #{model_forward.1} parent=76 // loop_footer
                  %s837 = sadd.s32 %s835, 1
                $region83: #{model_forward.1} parent=76 // loop_footer_branch
                  %834 = sbr.rel target = $region79
                $region84: #{model_forward.1} parent=76 // loop_exit
                  _
                %s1042 = sshrl.u32 %s830, 3
                %s1043 = sand.u32 %s830, 7
                %s1044 = smul.u32 %s1042, 8
                %s1045 = smul.u32 128, %s1044
                %s1046 = sshra.s32 %s1045, 4
                %s1047 = scalar_lea.vmem %s495, %s1046 [#allocation2]
                %s1048 = smul.u32 128, %s1044
                %s1049 = sshra.s32 %s1048, 4
                %s1050 = scalar_lea.vmem %s508, %s1049
                // While loop
                $region85: #{model_forward.1} parent=76 // loop_pre_header
                  _
                $region86: #{model_forward.1} parent=76 // loop_header
                  %s1054 = sphi 0, %s1056
                  %p1055 = scmp.ge.s32.totalorder %s1054, %s1043
                  %s1059 = sphi 0, %s1088
                  %s1060 = sphi %s1047, %s1091
                  %s1061 = sphi %s1050, %s1092
                $region87: #{model_forward.1} parent=76 // loop_header_branch
                  %1058 = sbr.rel (%p1055) target = $region91
                $region88: #{model_forward.1} parent=76 // loop_body
                  %v1062 = vld [vmem:[%s1060] sm:$0xff]
                  %1063 = vst [vmem:[%s1061] sm:$0xff] %v1062
                  %v1064 = vld [vmem:[%s1060 + $0x10] sm:$0xff]
                  %1065 = vst [vmem:[%s1061 + $0x18] sm:$0xff] %v1064
                  %v1066 = vld [vmem:[%s1060 + $0x20] sm:$0xff]
                  %1067 = vst [vmem:[%s1061 + $0x30] sm:$0xff] %v1066
                  %v1068 = vld [vmem:[%s1060 + $0x30] sm:$0xff]
                  %1069 = vst [vmem:[%s1061 + $0x48] sm:$0xff] %v1068
                  %v1070 = vld [vmem:[%s1060 + $0x40] sm:$0xff]
                  %1071 = vst [vmem:[%s1061 + $0x60] sm:$0xff] %v1070
                  %v1072 = vld [vmem:[%s1060 + $0x50] sm:$0xff]
                  %1073 = vst [vmem:[%s1061 + $0x78] sm:$0xff] %v1072
                  %v1074 = vld [vmem:[%s1060 + $0x60] sm:$0xff]
                  %1075 = vst [vmem:[%s1061 + $0x90] sm:$0xff] %v1074
                  %v1076 = vld [vmem:[%s1060 + $0x70] sm:$0xff]
                  %1077 = vst [vmem:[%s1061 + $0xa8] sm:$0xff] %v1076
                  %v1078 = vld [vmem:[%s1060 + $0x80] sm:$0xff]
                  %1079 = vst [vmem:[%s1061 + $0xc0] sm:$0xff] %v1078
                  %v1080 = vld [vmem:[%s1060 + $0x90] sm:$0xff]
                  %1081 = vst [vmem:[%s1061 + $0xd8] sm:$0xff] %v1080
                  %v1082 = vld [vmem:[%s1060 + $0xa0] sm:$0xff]
                  %1083 = vst [vmem:[%s1061 + $0xf0] sm:$0xff] %v1082
                  %v1084 = vld [vmem:[%s1060 + $0xb0] sm:$0xff]
                  %1085 = vst [vmem:[%s1061 + $0x108] sm:$0xff] %v1084
                  %s1086 = sadd.s32 1, %s1059
                  %p1087 = scmp.ge.s32.totalorder %s1086, %s1043
                  %s1088 = scalar_select %p1087, 0, %s1086
                  %s1089 = smul.u32 %s1088, 8
                  %s1090 = smul.u32 %s1088, 8
                  %s1091 = scalar_lea.vmem %s1047, %s1089 [#allocation2]
                  %s1092 = scalar_lea.vmem %s1050, %s1090
                $region89: #{model_forward.1} parent=76 // loop_footer
                  %s1056 = sadd.s32 %s1054, 1
                $region90: #{model_forward.1} parent=76 // loop_footer_branch
                  %1053 = sbr.rel target = $region86
                $region91: #{model_forward.1} parent=76 // loop_exit
                  _
                %s1093 = sshll.u32 1, %s825
                %s1094 = ssub.s32 %s1093, 1
                loop: start=0, step=1, limit=1
                $region92: #{model_forward.1} parent=76 // loop_pre_header
                  _
                $region93: #{model_forward.1} parent=76 // loop_header
                  %s1096 = sphi 0, %s1100
                  %p1097 = scmp.ge.s32.totalorder %s1096, 1
                  %s1101 = sphi %s827, %s827
                  %s1102 = sphi %s829, %s829
                $region94: #{model_forward.1} parent=76 // loop_header_branch
                  %1099 = sbr.rel (%p1097) target = $region98
                $region95: #{model_forward.1} parent=76 // loop_body
                  %v1103 = vld [vmem:[%s1101] sm:%s1094]
                  %1104 = vst [vmem:[%s1102] sm:%s1094] %v1103
                  %v1105 = vld [vmem:[%s1101 + $0x10] sm:%s1094]
                  %1106 = vst [vmem:[%s1102 + $0x18] sm:%s1094] %v1105
                  %v1107 = vld [vmem:[%s1101 + $0x20] sm:%s1094]
                  %1108 = vst [vmem:[%s1102 + $0x30] sm:%s1094] %v1107
                  %v1109 = vld [vmem:[%s1101 + $0x30] sm:%s1094]
                  %1110 = vst [vmem:[%s1102 + $0x48] sm:%s1094] %v1109
                  %v1111 = vld [vmem:[%s1101 + $0x40] sm:%s1094]
                  %1112 = vst [vmem:[%s1102 + $0x60] sm:%s1094] %v1111
                  %v1113 = vld [vmem:[%s1101 + $0x50] sm:%s1094]
                  %1114 = vst [vmem:[%s1102 + $0x78] sm:%s1094] %v1113
                  %v1115 = vld [vmem:[%s1101 + $0x60] sm:%s1094]
                  %1116 = vst [vmem:[%s1102 + $0x90] sm:%s1094] %v1115
                  %v1117 = vld [vmem:[%s1101 + $0x70] sm:%s1094]
                  %1118 = vst [vmem:[%s1102 + $0xa8] sm:%s1094] %v1117
                  %v1119 = vld [vmem:[%s1101 + $0x80] sm:%s1094]
                  %1120 = vst [vmem:[%s1102 + $0xc0] sm:%s1094] %v1119
                  %v1121 = vld [vmem:[%s1101 + $0x90] sm:%s1094]
                  %1122 = vst [vmem:[%s1102 + $0xd8] sm:%s1094] %v1121
                  %v1123 = vld [vmem:[%s1101 + $0xa0] sm:%s1094]
                  %1124 = vst [vmem:[%s1102 + $0xf0] sm:%s1094] %v1123
                  %v1125 = vld [vmem:[%s1101 + $0xb0] sm:%s1094]
                  %1126 = vst [vmem:[%s1102 + $0x108] sm:%s1094] %v1125
                $region96: #{model_forward.1} parent=76 // loop_footer
                  %s1100 = sadd.s32 1, %s1096
                $region97: #{model_forward.1} parent=76 // loop_footer_branch
                  %1095 = sbr.rel target = $region93
                $region98: #{model_forward.1} parent=76 // loop_exit
                  _
              $region77: #{model_forward.1} parent=43 // pred_fallthru
                _
            $region44: #{model_forward.1} parent=39 // pred_fallthru
              _
            // Predicated region
            $region45: #{model_forward.1} parent=39 // pred_check
              %p517 = pneg %p513
            $region46: #{model_forward.1} parent=39 // pred_check_branch
              %519 = sbr.rel (%p517) target = $region48
            $region47: #{model_forward.1} parent=39 // pred_region
              %s520 = sshll.u32 1, %s509
              %s521 = ssub.s32 %s520, 1
              loop: start=0, step=1, limit=1
              $region49: #{model_forward.1} parent=47 // loop_pre_header
                _
              $region50: #{model_forward.1} parent=47 // loop_header
                %s523 = sphi 0, %s527
                %p524 = scmp.ge.s32.totalorder %s523, 1
                %s528 = sphi %s495, %s495
                %s529 = sphi %s508, %s508
              $region51: #{model_forward.1} parent=47 // loop_header_branch
                %526 = sbr.rel (%p524) target = $region55
              $region52: #{model_forward.1} parent=47 // loop_body
                %v530 = vld [vmem:[%s528] sm:%s521]
                %531 = vst [vmem:[%s529] sm:%s521] %v530
                %v532 = vld [vmem:[%s528 + $0x10] sm:%s521]
                %533 = vst [vmem:[%s529 + $0x18] sm:%s521] %v532
                %v534 = vld [vmem:[%s528 + $0x20] sm:%s521]
                %535 = vst [vmem:[%s529 + $0x30] sm:%s521] %v534
                %v536 = vld [vmem:[%s528 + $0x30] sm:%s521]
                %537 = vst [vmem:[%s529 + $0x48] sm:%s521] %v536
                %v538 = vld [vmem:[%s528 + $0x40] sm:%s521]
                %539 = vst [vmem:[%s529 + $0x60] sm:%s521] %v538
                %v540 = vld [vmem:[%s528 + $0x50] sm:%s521]
                %541 = vst [vmem:[%s529 + $0x78] sm:%s521] %v540
                %v542 = vld [vmem:[%s528 + $0x60] sm:%s521]
                %543 = vst [vmem:[%s529 + $0x90] sm:%s521] %v542
                %v544 = vld [vmem:[%s528 + $0x70] sm:%s521]
                %545 = vst [vmem:[%s529 + $0xa8] sm:%s521] %v544
                %v546 = vld [vmem:[%s528 + $0x80] sm:%s521]
                %547 = vst [vmem:[%s529 + $0xc0] sm:%s521] %v546
                %v548 = vld [vmem:[%s528 + $0x90] sm:%s521]
                %549 = vst [vmem:[%s529 + $0xd8] sm:%s521] %v548
                %v550 = vld [vmem:[%s528 + $0xa0] sm:%s521]
                %551 = vst [vmem:[%s529 + $0xf0] sm:%s521] %v550
                %v552 = vld [vmem:[%s528 + $0xb0] sm:%s521]
                %553 = vst [vmem:[%s529 + $0x108] sm:%s521] %v552
              $region53: #{model_forward.1} parent=47 // loop_footer
                %s527 = sadd.s32 1, %s523
              $region54: #{model_forward.1} parent=47 // loop_footer_branch
                %522 = sbr.rel target = $region50
              $region55: #{model_forward.1} parent=47 // loop_exit
                _
            $region48: #{model_forward.1} parent=39 // pred_fallthru
              _
          $region40: #{model_forward.1} parent=35 // pred_fallthru
            _
          %1127 = vnop
        $region36: #{model_forward.1} parent=31 // pred_fallthru
          _
      $region32: #{model_forward.1} parent=5 // pred_fallthru
        _
      %p1128 = scmp.le.s32.totalorder 2, %s9
      // Predicated region
      $region99: #{model_forward.1} parent=5 // pred_check
        %p1129 = pneg %p1128
      $region100: #{model_forward.1} parent=5 // pred_check_branch
        %1131 = sbr.rel (%p1129) target = $region102
      $region101: #{model_forward.1} parent=5 // pred_region
        %s1132 = ssub.s32 %s9, 2
        // Predicated region
        $region103: #{model_forward.1} parent=101 // pred_check
          %p1133 = pneg %p122
        $region104: #{model_forward.1} parent=101 // pred_check_branch
          %1135 = sbr.rel (%p1133) target = $region106
        $region105: #{model_forward.1} parent=101 // pred_region
          %s1136 = sand.u32 %s107, 1
          %s1137 = sand.u32 %s107, 1
          %s1138 = smul.addr %s1137, 192
          %s1139 = scalar_lea.vmem [#allocation2], %s1138
        $region106: #{model_forward.1} parent=101 // pred_fallthru
          _
      $region102: #{model_forward.1} parent=5 // pred_fallthru
        _
    $region6: #{model_forward.1} parent=1 // loop_footer
      %s13 = sadd.s32 1, %s9
    $region7: #{model_forward.1} parent=1 // loop_footer_branch
      %8 = sbr.rel target = $region3
    $region8: #{model_forward.1} parent=1 // loop_exit
      _

</llo_original>
